<compile_context>
chip_gen: v5e
topology: v5e:2x2
jax: 0.10.0
libtpu: 0.0.40
codegen_flags: <defaults>
</compile_context>

<pallas_src>
import jax
import jax.numpy as jnp
from jax.experimental import pallas as pl
from jax.experimental.pallas import tpu as pltpu


def _attention_kernel(x_ref, w0_ref, w1_ref, w2_ref, o_ref):
    # x_ref / o_ref: (C, TILE) channels-first tile (pixels lane-dense).
    # w*_ref: (C, C) bf16 1x1-conv weights, VMEM-resident (constant index_map).
    x_in = x_ref[...]
    x_bf = x_in.astype(jnp.bfloat16)          # MXU operand

    # y = ReLU(conv_0(x)); t = ReLU(conv(y)); logits = conv(t)
    # bf16 operands, f32 accumulation on the MXU.
    # TODO(synk): if the bundle dump shows stationary re-loads every 128 lanes,
    # consider the explicit pltpu.matmul_push_rhs/matmul_acc_lhs path to hold
    # the CxC weight stationary across the whole tile.
    y = jnp.maximum(
        jnp.dot(w0_ref[...], x_bf, preferred_element_type=jnp.float32), 0.0)
    t = jnp.maximum(
        jnp.dot(w1_ref[...], y.astype(jnp.bfloat16),
                preferred_element_type=jnp.float32), 0.0)
    logits = jnp.dot(w2_ref[...], t.astype(jnp.bfloat16),
                     preferred_element_type=jnp.float32)

    # sigmoid(x) = 0.5 * tanh(0.5 x) + 0.5 : one EUP op per element (vs
    # exp + reciprocal = two pushes through the single EUP slot), and exact.
    z = 0.5 * jnp.tanh(0.5 * logits) + 0.5

    # out = z * y + x  (residual uses the original x tile, in f32).
    o_ref[...] = (z * y + x_in.astype(jnp.float32)).astype(o_ref.dtype)


def _round_up(x, m):
    return ((x + m - 1) // m) * m


def attention_module(x_nchw, w0, w1, w2, *, tile_m=None):
    """Fused AttentionModule forward.

    x_nchw: (N, C, H, W); w*: (C, C) or (C, C, 1, 1) bias-free 1x1-conv weights.
    """
    N, C, H, W = x_nchw.shape
    HW = H * W

    # Channels-first slab: free reshape; pixels land in the lane dimension.
    x_slab = x_nchw.reshape(N, C, HW)
    io_dtype = x_slab.dtype
    io_bytes = jnp.dtype(io_dtype).itemsize

    # 1x1-conv weights -> (C_out, C_in) bf16 MXU operands.
    def _prep_w(w):
        if w.ndim == 4:
            w = w.reshape(w.shape[0], w.shape[1])
        return w.astype(jnp.bfloat16)

    w0, w1, w2 = _prep_w(w0), _prep_w(w1), _prep_w(w2)

    # Generation-aware VMEM budget (v5e/v6e: 128 MiB, v7x: 64 MiB per core).
    try:
        info = pltpu.get_tpu_info()
        vmem_cap = int(getattr(info, "vmem_capacity_bytes", 0)) or (64 << 20)
    except Exception:  # conservative fallback valid on every generation
        vmem_cap = 64 << 20
    budget = int(0.75 * vmem_cap)

    # Size the pixel tile so ~2x the live working set fits inside the budget:
    # 2x-buffered input + output tiles (io dtype) plus ~10 f32-equivalent
    # (C, tile) intermediates (x_f32, y, t, logits, z, bf16 casts, slack).
    per_pixel_bytes = C * (4 * io_bytes + 10 * 4)
    max_tile = ((budget // 2) // per_pixel_bytes) // 128 * 128
    max_tile = max(128, min(max_tile, 32768))
    if tile_m is not None:
        max_tile = max(128, min(max_tile, _round_up(tile_m, 128)))

    if HW % 128 == 0:
        tile = min(max_tile, HW)
    elif HW <= max_tile:
        tile = HW            # single full-extent block: no padding needed
    else:
        tile = max_tile      # ragged last block; Pallas drops OOB writes

    # v7x megacore: guarantee >= 2 steps along a "parallel" axis when N == 1.
    if N == 1 and pl.cdiv(HW, tile) == 1 and tile >= 256:
        half = _round_up(tile // 2, 128)
        if half < tile:
            tile = half

    grid = (N, pl.cdiv(HW, tile))

    out_slab = pl.pallas_call(
        _attention_kernel,
        out_shape=jax.ShapeDtypeStruct((N, C, HW), io_dtype),
        grid_spec=pltpu.PrefetchScalarGridSpec(
            num_scalar_prefetch=0,
            grid=grid,
            in_specs=[
                pl.BlockSpec((None, C, tile), lambda n, p: (n, 0, p)),  # x tile
                # Weights: constant index_map -> VMEM-resident across the grid.
                # TODO(synk): at large C on v7x, mark these with
                # pipeline_mode=pl.Buffered(1) to drop the redundant second
                # pipeline buffer per weight.
                pl.BlockSpec((C, C), lambda n, p: (0, 0)),              # w0
                pl.BlockSpec((C, C), lambda n, p: (0, 0)),              # w1
                pl.BlockSpec((C, C), lambda n, p: (0, 0)),              # w2
            ],
            out_specs=pl.BlockSpec((None, C, tile), lambda n, p: (n, 0, p)),
        ),
        compiler_params=pltpu.CompilerParams(
            dimension_semantics=("parallel", "parallel"),
            vmem_limit_bytes=budget,
        ),
    )(x_slab, w0, w1, w2)

    return out_slab.reshape(N, C, H, W)


def _reference(x_nchw, w0, w1, w2):
    # Pure-JAX f32 reference matching the PyTorch forward (channels-first).
    N, C, H, W = x_nchw.shape
    x = x_nchw.reshape(N, C, H * W).astype(jnp.float32)
    y = jax.nn.relu(jnp.einsum("oc,ncp->nop", w0, x))
    t = jax.nn.relu(jnp.einsum("oc,ncp->nop", w1, y))
    z = jax.nn.sigmoid(jnp.einsum("oc,ncp->nop", w2, t))
    return (z * y + x).reshape(N, C, H, W).astype(x_nchw.dtype)


if __name__ == "__main__":
    key = jax.random.PRNGKey(0)
    N, C, H, W = 2, 32, 16, 16
    k_x, k0, k1, k2 = jax.random.split(key, 4)

    x = jax.random.normal(k_x, (N, C, H, W), dtype=jnp.float32)
    # Conv2d(channel, channel, 1, bias=False) weights: (C_out, C_in, 1, 1) -> (C_out, C_in)
    scale = 1.0 / jnp.sqrt(C)
    w0 = jax.random.uniform(k0, (C, C), jnp.float32, -scale, scale)
    w1 = jax.random.uniform(k1, (C, C), jnp.float32, -scale, scale)
    w2 = jax.random.uniform(k2, (C, C), jnp.float32, -scale, scale)

    out = attention_module(x, w0, w1, w2)
    out = jax.block_until_ready(out)

    ref = _reference(x, w0, w1, w2)
    assert out.shape == x.shape
    # bf16 MXU operands (f32 accumulation) vs the exact-f32 reference: a few
    # 1e-3 of absolute error at this value scale, so use a safe tolerance.
    assert jnp.allclose(out, ref, atol=5e-2, rtol=5e-2), "mismatch vs reference"
    print("KERNEL_OK")
</pallas_src>

<mosaic_0001>
module attributes {stable_mosaic.version = 11 : i64} {
  func.func @_attention_kernel(%arg0: i32, %arg1: i32, %arg2: memref<1x32x256xf32, #tpu.memory_space<vmem>>, %arg3: memref<32x32xbf16, #tpu.memory_space<vmem>>, %arg4: memref<32x32xbf16, #tpu.memory_space<vmem>>, %arg5: memref<32x32xbf16, #tpu.memory_space<vmem>>, %arg6: memref<1x32x256xf32, #tpu.memory_space<vmem>>) attributes {dimension_semantics = [#tpu.dimension_semantics<parallel>, #tpu.dimension_semantics<parallel>], iteration_bounds = array<i64: 2, 1>, scalar_prefetch = 0 : i64, scratch_operands = 0 : i64, tpu.core_type = #tpu.core_type<tc>, window_params = [{transform_indices = @transform_0, window_bounds = array<i64: 1, 32, 256>}, {pipeline_mode = #tpu.pipeline_mode<synchronous>, transform_indices = @transform_1, window_bounds = array<i64: 32, 32>}, {pipeline_mode = #tpu.pipeline_mode<synchronous>, transform_indices = @transform_2, window_bounds = array<i64: 32, 32>}, {pipeline_mode = #tpu.pipeline_mode<synchronous>, transform_indices = @transform_3, window_bounds = array<i64: 32, 32>}, {transform_indices = @transform_4, window_bounds = array<i64: 1, 32, 256>}]} {
    %c0 = arith.constant 0 : index
    %c0_0 = arith.constant 0 : index
    %c0_1 = arith.constant 0 : index
    %0 = vector.load %arg2[%c0, %c0_0, %c0_1] : memref<1x32x256xf32, #tpu.memory_space<vmem>>, vector<1x32x256xf32>
    %1 = vector.shape_cast %0 : vector<1x32x256xf32> to vector<32x256xf32>
    %2 = arith.truncf %1 : vector<32x256xf32> to vector<32x256xbf16>
    %c0_2 = arith.constant 0 : index
    %c0_3 = arith.constant 0 : index
    %3 = vector.load %arg3[%c0_2, %c0_3] : memref<32x32xbf16, #tpu.memory_space<vmem>>, vector<32x32xbf16>
    %cst = arith.constant dense<0.000000e+00> : vector<32x256xf32>
    %4 = tpu.matmul %3, %2, %cst {dimension_numbers = #tpu.dot_dimension_numbers<[1], [0], [0], [1], [0, 0, 1, 1], [], []>} : vector<32x32xbf16>, vector<32x256xbf16>, vector<32x256xf32> -> vector<32x256xf32>
    %cst_4 = arith.constant 0.000000e+00 : f32
    %5 = vector.broadcast %cst_4 : f32 to vector<32x256xf32>
    %6 = arith.maximumf %4, %5 : vector<32x256xf32>
    %c0_5 = arith.constant 0 : index
    %c0_6 = arith.constant 0 : index
    %7 = vector.load %arg4[%c0_5, %c0_6] : memref<32x32xbf16, #tpu.memory_space<vmem>>, vector<32x32xbf16>
    %8 = arith.truncf %6 : vector<32x256xf32> to vector<32x256xbf16>
    %cst_7 = arith.constant dense<0.000000e+00> : vector<32x256xf32>
    %9 = tpu.matmul %7, %8, %cst_7 {dimension_numbers = #tpu.dot_dimension_numbers<[1], [0], [0], [1], [0, 0, 1, 1], [], []>} : vector<32x32xbf16>, vector<32x256xbf16>, vector<32x256xf32> -> vector<32x256xf32>
    %cst_8 = arith.constant 0.000000e+00 : f32
    %10 = vector.broadcast %cst_8 : f32 to vector<32x256xf32>
    %11 = arith.maximumf %9, %10 : vector<32x256xf32>
    %c0_9 = arith.constant 0 : index
    %c0_10 = arith.constant 0 : index
    %12 = vector.load %arg5[%c0_9, %c0_10] : memref<32x32xbf16, #tpu.memory_space<vmem>>, vector<32x32xbf16>
    %13 = arith.truncf %11 : vector<32x256xf32> to vector<32x256xbf16>
    %cst_11 = arith.constant dense<0.000000e+00> : vector<32x256xf32>
    %14 = tpu.matmul %12, %13, %cst_11 {dimension_numbers = #tpu.dot_dimension_numbers<[1], [0], [0], [1], [0, 0, 1, 1], [], []>} : vector<32x32xbf16>, vector<32x256xbf16>, vector<32x256xf32> -> vector<32x256xf32>
    %cst_12 = arith.constant 5.000000e-01 : f32
    %15 = vector.broadcast %cst_12 : f32 to vector<32x256xf32>
    %16 = arith.mulf %15, %14 : vector<32x256xf32>
    %17 = math.tanh %16 : vector<32x256xf32>
    %cst_13 = arith.constant 5.000000e-01 : f32
    %18 = vector.broadcast %cst_13 : f32 to vector<32x256xf32>
    %19 = arith.mulf %18, %17 : vector<32x256xf32>
    %cst_14 = arith.constant 5.000000e-01 : f32
    %20 = vector.broadcast %cst_14 : f32 to vector<32x256xf32>
    %21 = arith.addf %19, %20 : vector<32x256xf32>
    %22 = arith.mulf %21, %6 : vector<32x256xf32>
    %23 = arith.addf %22, %1 : vector<32x256xf32>
    %c0_15 = arith.constant 0 : index
    %c0_16 = arith.constant 0 : index
    %c0_17 = arith.constant 0 : index
    %24 = vector.load %arg6[%c0_15, %c0_16, %c0_17] : memref<1x32x256xf32, #tpu.memory_space<vmem>>, vector<1x32x256xf32>
    %25 = vector.shape_cast %24 : vector<1x32x256xf32> to vector<32x256xf32>
    %26 = vector.shape_cast %23 : vector<32x256xf32> to vector<1x32x256xf32>
    tpu.vector_store %arg6[%c0_15, %c0_16, %c0_17], %26 {strides = array<i32>} : memref<1x32x256xf32, #tpu.memory_space<vmem>>, vector<1x32x256xf32>,
    return
  }
  func.func @transform_0(%arg0: i32, %arg1: i32) -> (i32, i32, i32) {
    %c0_i32 = arith.constant 0 : i32
    %c0_i32_0 = arith.constant 0 : i32
    return %arg0, %c0_i32, %arg1 : i32, i32, i32
  }
  func.func @transform_1(%arg0: i32, %arg1: i32) -> (i32, i32) {
    %c0_i32 = arith.constant 0 : i32
    %c0_i32_0 = arith.constant 0 : i32
    %c0_i32_1 = arith.constant 0 : i32
    return %c0_i32, %c0_i32_0 : i32, i32
  }
  func.func @transform_2(%arg0: i32, %arg1: i32) -> (i32, i32) {
    %c0_i32 = arith.constant 0 : i32
    %c0_i32_0 = arith.constant 0 : i32
    %c0_i32_1 = arith.constant 0 : i32
    return %c0_i32, %c0_i32_0 : i32, i32
  }
  func.func @transform_3(%arg0: i32, %arg1: i32) -> (i32, i32) {
    %c0_i32 = arith.constant 0 : i32
    %c0_i32_0 = arith.constant 0 : i32
    %c0_i32_1 = arith.constant 0 : i32
    return %c0_i32, %c0_i32_0 : i32, i32
  }
  func.func @transform_4(%arg0: i32, %arg1: i32) -> (i32, i32, i32) {
    %c0_i32 = arith.constant 0 : i32
    %c0_i32_0 = arith.constant 0 : i32
    return %arg0, %c0_i32, %arg1 : i32, i32, i32
  }
}

</mosaic_0001>

<llo_original>
// kernel: tpu_custom_call.1
$region0: #{tpu_custom_call.1}
  #allocation0 [shape = 'u32[]', space=smem, size = 0x4, offset = 0x4, fixed_abs, tag = 'smem constant byte address 0x4 - core index']
  #allocation1 [shape = 'u32[72,128]{1,0:T(1,128)}', space=vmem, size = 0x9000, scoped, tag = 'internal scratch']
  %s0 = inlined_call_operand.hbm [shape: f32[2,32,256], index: 0, kind: input, shape index: {}]
  %s1 = inlined_call_operand.hbm [shape: bf16[32,32], index: 1, kind: input, shape index: {}]
  %s2 = inlined_call_operand.hbm [shape: bf16[32,32], index: 2, kind: input, shape index: {}]
  %s3 = inlined_call_operand.hbm [shape: bf16[32,32], index: 3, kind: input, shape index: {}]
  %s4 = inlined_call_operand.hbm [shape: f32[2,32,256], index: 4, kind: output, shape index: {}]
  %s5 = sld [smem:[#allocation0]]
  $region65: #{tpu_custom_call.1} parent=0
    _
  %s7 = ssub.s32 1, %s5
  %s8 = scalar_select 0, %s7, %s5
  $region1: #{tpu_custom_call.1} parent=0
    #allocation2 [shape = 'u8[65536]{0}', space=vmem, size = 0x10000, scoped, tag = 'input window, operand 0']
    #allocation3 [shape = 's32[2]{0}', space=sflag, size = 0x8, scoped, tag = 'scoped memory for tpu_custom_call.1']
    #allocation4 [shape = 's32[2]{0}', space=sflag, size = 0x8, scoped, tag = 'scoped memory for tpu_custom_call.1']
    #allocation5 [shape = 'u8[8192]{0}', space=vmem, size = 0x2000, scoped, tag = 'input window, operand 1, single buffered']
    #allocation6 [shape = 's32[1]{0}', space=sflag, size = 0x4, scoped, tag = 'scoped memory for tpu_custom_call.1']
    #allocation7 [shape = 'u8[8192]{0}', space=vmem, size = 0x2000, scoped, tag = 'input window, operand 2, single buffered']
    #allocation8 [shape = 'u8[8192]{0}', space=vmem, size = 0x2000, scoped, tag = 'input window, operand 3, single buffered']
    #allocation9 [shape = 's32[1]{0}', space=sflag, size = 0x4, scoped, tag = 'scoped memory for tpu_custom_call.1']
    #allocation10 [shape = 'u8[65536]{0}', space=vmem, size = 0x10000, scoped, tag = 'output window, operand 0']
    %9 = vsyncpa [#allocation3], 0
    %s10 = scalar_lea.sflag [#allocation3], 1
    %11 = vsyncpa %s10, 0
    %12 = vsyncpa [#allocation6], 0
    %13 = vsyncpa [#allocation9], 0
    %14 = vsyncpa [#allocation4], 0
    %s15 = scalar_lea.sflag [#allocation4], 1
    %16 = vsyncpa %s15, 0
    loop: start=0, step=1, limit=4
    $region2: #{tpu_custom_call.1} parent=1 // loop_pre_header
      _
    $region3: #{tpu_custom_call.1} parent=1 // loop_header
      %s18 = sphi 0, %s22
      %p19 = scmp.ge.s32.totalorder %s18, 4
      %s25 = sphi 0, %s37
      %s26 = sphi 0, %s33
      %s27 = sphi 0, %s25
      %s28 = sphi 0, %s26
      %s29 = sphi 0, %s27
      %s30 = sphi 0, %s28
      %s42 = sphi 0, %s44
      %s45 = sphi 0, %s42
      %s46 = sphi 0, %s45
      %s62 = sphi 0, %s46
      %s66 = sphi 0, %s66
      %s68 = sphi 0, %s66
      %s69 = sphi 0, %s68
      %s83 = sphi 0, %s69
      %s87 = sphi 0, %s87
      %s89 = sphi 0, %s87
      %s90 = sphi 0, %s89
      %s104 = sphi 0, %s90
      %s108 = sphi 0, %s108
      %s110 = sphi 0, %s108
      %s111 = sphi 0, %s110
      %s125 = sphi 0, %s111
      %s133 = sphi 0, %s135
      %s136 = sphi 0, %s133
      %s137 = sphi 0, %s136
      %s153 = sphi 0, %s137
    $region4: #{tpu_custom_call.1} parent=1 // loop_header_branch
      %21 = sbr.rel (%p19) target = $region8
    $region5: #{tpu_custom_call.1} parent=1 // loop_body
      %s23 = ssub.s32 %s18, 1
      %s24 = ssub.s32 %s18, 2
      %s31 = sadd.s32 1, %s26
      %p32 = scmp.ge.s32.totalorder %s31, 1
      %s33 = scalar_select %p32, 0, %s31
      %s34 = sadd.s32 1, %s25
      %s35 = scalar_select %p32, %s34, %s25
      %p36 = scmp.ge.s32.totalorder %s35, 2
      %s37 = scalar_select %p36, 0, %s35
      %s38 = ssub.s32 %s25, %s37
      %s39 = ssub.s32 %s26, %s33
      %s40 = sor.u32 %s38, %s39
      %p41 = scmp.eq.s32.totalorder %s40, 0
      %s43 = sadd.s32 %s42, 1
      %s44 = scalar_select %p41, %s42, %s43
      %p47 = pneg %p41
      %p48 = scmp.eq.s32.totalorder %s18, 1
      %p49 = por %p47, %p48
      %p50 = scmp.ne.s32.totalorder %s42, %s45
      %p51 = scmp.eq.s32.totalorder %s18, 0
      %p52 = por %p50, %p51
      %p53 = scmp.ne.s32.totalorder %s42, %s45
      %p54 = scmp.eq.s32.totalorder %s23, 1
      %p55 = por %p53, %p54
      %p56 = scmp.ne.s32.totalorder %s45, %s46
      %p57 = scmp.eq.s32.totalorder %s23, 0
      %p58 = por %p56, %p57
      %p59 = scmp.ne.s32.totalorder %s45, %s46
      %p60 = scmp.eq.s32.totalorder %s24, 1
      %p61 = por %p59, %p60
      %p63 = scmp.ne.s32.totalorder %s46, %s62
      %p64 = scmp.eq.s32.totalorder %s24, 0
      %p65 = por %p63, %p64
      %s67 = sadd.s32 %s66, 1
      %p70 = scmp.eq.s32.totalorder %s18, 1
      %p71 = scmp.ne.s32.totalorder %s66, %s68
      %p72 = scmp.eq.s32.totalorder %s18, 0
      %p73 = por %p71, %p72
      %p74 = scmp.ne.s32.totalorder %s66, %s68
      %p75 = scmp.eq.s32.totalorder %s23, 1
      %p76 = por %p74, %p75
      %p77 = scmp.ne.s32.totalorder %s68, %s69
      %p78 = scmp.eq.s32.totalorder %s23, 0
      %p79 = por %p77, %p78
      %p80 = scmp.ne.s32.totalorder %s68, %s69
      %p81 = scmp.eq.s32.totalorder %s24, 1
      %p82 = por %p80, %p81
      %p84 = scmp.ne.s32.totalorder %s69, %s83
      %p85 = scmp.eq.s32.totalorder %s24, 0
      %p86 = por %p84, %p85
      %s88 = sadd.s32 %s87, 1
      %p91 = scmp.eq.s32.totalorder %s18, 1
      %p92 = scmp.ne.s32.totalorder %s87, %s89
      %p93 = scmp.eq.s32.totalorder %s18, 0
      %p94 = por %p92, %p93
      %p95 = scmp.ne.s32.totalorder %s87, %s89
      %p96 = scmp.eq.s32.totalorder %s23, 1
      %p97 = por %p95, %p96
      %p98 = scmp.ne.s32.totalorder %s89, %s90
      %p99 = scmp.eq.s32.totalorder %s23, 0
      %p100 = por %p98, %p99
      %p101 = scmp.ne.s32.totalorder %s89, %s90
      %p102 = scmp.eq.s32.totalorder %s24, 1
      %p103 = por %p101, %p102
      %p105 = scmp.ne.s32.totalorder %s90, %s104
      %p106 = scmp.eq.s32.totalorder %s24, 0
      %p107 = por %p105, %p106
      %s109 = sadd.s32 %s108, 1
      %p112 = scmp.eq.s32.totalorder %s18, 1
      %p113 = scmp.ne.s32.totalorder %s108, %s110
      %p114 = scmp.eq.s32.totalorder %s18, 0
      %p115 = por %p113, %p114
      %p116 = scmp.ne.s32.totalorder %s108, %s110
      %p117 = scmp.eq.s32.totalorder %s23, 1
      %p118 = por %p116, %p117
      %p119 = scmp.ne.s32.totalorder %s110, %s111
      %p120 = scmp.eq.s32.totalorder %s23, 0
      %p121 = por %p119, %p120
      %p122 = scmp.ne.s32.totalorder %s110, %s111
      %p123 = scmp.eq.s32.totalorder %s24, 1
      %p124 = por %p122, %p123
      %p126 = scmp.ne.s32.totalorder %s111, %s125
      %p127 = scmp.eq.s32.totalorder %s24, 0
      %p128 = por %p126, %p127
      %s129 = ssub.s32 %s25, %s37
      %s130 = ssub.s32 %s26, %s33
      %s131 = sor.u32 %s129, %s130
      %p132 = scmp.eq.s32.totalorder %s131, 0
      %s134 = sadd.s32 %s133, 1
      %s135 = scalar_select %p132, %s133, %s134
      %p138 = pneg %p132
      %p139 = scmp.eq.s32.totalorder %s18, 1
      %p140 = por %p138, %p139
      %p141 = scmp.ne.s32.totalorder %s133, %s136
      %p142 = scmp.eq.s32.totalorder %s18, 0
      %p143 = por %p141, %p142
      %p144 = scmp.ne.s32.totalorder %s133, %s136
      %p145 = scmp.eq.s32.totalorder %s23, 1
      %p146 = por %p144, %p145
      %p147 = scmp.ne.s32.totalorder %s136, %s137
      %p148 = scmp.eq.s32.totalorder %s23, 0
      %p149 = por %p147, %p148
      %p150 = scmp.ne.s32.totalorder %s136, %s137
      %p151 = scmp.eq.s32.totalorder %s24, 1
      %p152 = por %p150, %p151
      %p154 = scmp.ne.s32.totalorder %s137, %s153
      %p155 = scmp.eq.s32.totalorder %s24, 0
      %p156 = por %p154, %p155
      %p157 = scmp.le.s32.totalorder 1, %s18
      %p158 = scmp.lt.s32.totalorder %s18, 3
      %p159 = pnand %p157, %p158
      %p160 = pneg %p159
      // Predicated region
      $region9: #{tpu_custom_call.1} parent=5 // pred_check
        _
      $region10: #{tpu_custom_call.1} parent=5 // pred_check_branch
        %162 = sbr.rel (%p159) target = $region12
      $region11: #{tpu_custom_call.1} parent=5 // pred_region
        %s163 = ssub.s32 %s18, 1
        // Predicated region
        $region13: #{tpu_custom_call.1} parent=11 // pred_check
          %p164 = pneg %p79
        $region14: #{tpu_custom_call.1} parent=11 // pred_check_branch
          %166 = sbr.rel (%p164) target = $region16
        $region15: #{tpu_custom_call.1} parent=11 // pred_region
          %168 = vsyncadd [#allocation6], 0
          %s169 = sshll.u32 %s1, 4
          %s170 = int_to_ptr.hbm [resolvable:$true] %s169
          %s171 = sshll.u32 [#allocation5], 4
          %s172 = int_to_ptr.vmem [resolvable:$true] %s171
          %177 = dma.hbm_to_vmem [thread:$0]  %s170, 256, %s172, [#allocation6], 64, 64, 4
        $region16: #{tpu_custom_call.1} parent=11 // pred_fallthru
          _
        // Predicated region
        $region17: #{tpu_custom_call.1} parent=11 // pred_check
          %p178 = pneg %p100
        $region18: #{tpu_custom_call.1} parent=11 // pred_check_branch
          %180 = sbr.rel (%p178) target = $region20
        $region19: #{tpu_custom_call.1} parent=11 // pred_region
          %182 = vsyncadd [#allocation6], 0
          %s183 = sshll.u32 %s2, 4
          %s184 = int_to_ptr.hbm [resolvable:$true] %s183
          %s185 = sshll.u32 [#allocation7], 4
          %s186 = int_to_ptr.vmem [resolvable:$true] %s185
          %191 = dma.hbm_to_vmem [thread:$0]  %s184, 256, %s186, [#allocation6], 64, 64, 4
        $region20: #{tpu_custom_call.1} parent=11 // pred_fallthru
          _
        // Predicated region
        $region21: #{tpu_custom_call.1} parent=11 // pred_check
          %p192 = pneg %p121
        $region22: #{tpu_custom_call.1} parent=11 // pred_check_branch
          %194 = sbr.rel (%p192) target = $region24
        $region23: #{tpu_custom_call.1} parent=11 // pred_region
          %196 = vsyncadd [#allocation9], 0
          %s197 = sshll.u32 %s3, 4
          %s198 = int_to_ptr.hbm [resolvable:$true] %s197
          %s199 = sshll.u32 [#allocation8], 4
          %s200 = int_to_ptr.vmem [resolvable:$true] %s199
          %205 = dma.hbm_to_vmem [thread:$0]  %s198, 256, %s200, [#allocation9], 64, 64, 4
        $region24: #{tpu_custom_call.1} parent=11 // pred_fallthru
          _
      $region12: #{tpu_custom_call.1} parent=5 // pred_fallthru
        _
      %p206 = scmp.lt.s32.totalorder %s18, 2
      // Predicated region
      $region25: #{tpu_custom_call.1} parent=5 // pred_check
        %p207 = pneg %p206
      $region26: #{tpu_custom_call.1} parent=5 // pred_check_branch
        %209 = sbr.rel (%p207) target = $region28
      $region27: #{tpu_custom_call.1} parent=5 // pred_region
        // Predicated region
        $region29: #{tpu_custom_call.1} parent=27 // pred_check
          %p210 = pneg %p52
        $region30: #{tpu_custom_call.1} parent=27 // pred_check_branch
          %212 = sbr.rel (%p210) target = $region32
        $region31: #{tpu_custom_call.1} parent=27 // pred_region
          %s213 = sand.u32 %s42, 1
          %s214 = scalar_lea.sflag [#allocation3], %s213
          %s215 = sand.u32 %s42, 1
          %s216 = smul.addr %s215, 64
          %s217 = scalar_lea.vmem [#allocation2], %s216
          %s218 = smul.u32 2, %s26
          %220 = vsyncadd %s214, 0
          %s221 = smul.addr %s25, 8
          %s222 = sadd.s32 %s218, %s221
          %s223 = smul.addr %s222, 8
          %s224 = scalar_lea.hbm %s0, %s223
          %s225 = sshll.u32 %s224, 4
          %s226 = int_to_ptr.hbm [resolvable:$true] %s225
          %s227 = sshll.u32 %s217, 4
          %s228 = int_to_ptr.vmem [resolvable:$true] %s227
          %233 = dma.hbm_to_vmem [thread:$0]  %s226, 1024, %s228, %s214, 256, 256, 16
        $region32: #{tpu_custom_call.1} parent=27 // pred_fallthru
          _
      $region28: #{tpu_custom_call.1} parent=5 // pred_fallthru
        _
      %p234 = scmp.le.s32.totalorder 1, %s18
      %p235 = scmp.lt.s32.totalorder %s18, 3
      %p236 = pnand %p234, %p235
      %p237 = pneg %p236
      // Predicated region
      $region33: #{tpu_custom_call.1} parent=5 // pred_check
        _
      $region34: #{tpu_custom_call.1} parent=5 // pred_check_branch
        %239 = sbr.rel (%p236) target = $region36
      $region35: #{tpu_custom_call.1} parent=5 // pred_region
        %s240 = ssub.s32 %s18, 1
        %s241 = sand.u32 %s45, 1
        %s242 = scalar_lea.sflag [#allocation3], %s241
        %s243 = sand.u32 %s45, 1
        %s244 = smul.addr %s243, 64
        %s245 = scalar_lea.vmem [#allocation2], %s244
        // Predicated region
        $region37: #{tpu_custom_call.1} parent=35 // pred_check
          %p246 = pneg %p58
        $region38: #{tpu_custom_call.1} parent=35 // pred_check_branch
          %248 = sbr.rel (%p246) target = $region40
        $region39: #{tpu_custom_call.1} parent=35 // pred_region
          %250 = dma.done %s242, 1024
        $region40: #{tpu_custom_call.1} parent=35 // pred_fallthru
          _
        // Predicated region
        $region41: #{tpu_custom_call.1} parent=35 // pred_check
          %p251 = pneg %p79
        $region42: #{tpu_custom_call.1} parent=35 // pred_check_branch
          %253 = sbr.rel (%p251) target = $region44
        $region43: #{tpu_custom_call.1} parent=35 // pred_region
          %255 = dma.done [#allocation6], 256
        $region44: #{tpu_custom_call.1} parent=35 // pred_fallthru
          _
        // Predicated region
        $region45: #{tpu_custom_call.1} parent=35 // pred_check
          %p256 = pneg %p100
        $region46: #{tpu_custom_call.1} parent=35 // pred_check_branch
          %258 = sbr.rel (%p256) target = $region48
        $region47: #{tpu_custom_call.1} parent=35 // pred_region
          %260 = dma.done [#allocation6], 256
        $region48: #{tpu_custom_call.1} parent=35 // pred_fallthru
          _
        // Predicated region
        $region49: #{tpu_custom_call.1} parent=35 // pred_check
          %p261 = pneg %p121
        $region50: #{tpu_custom_call.1} parent=35 // pred_check_branch
          %263 = sbr.rel (%p261) target = $region52
        $region51: #{tpu_custom_call.1} parent=35 // pred_region
          %265 = dma.done [#allocation9], 256
        $region52: #{tpu_custom_call.1} parent=35 // pred_fallthru
          _
        %s266 = sand.u32 %s45, 1
        %s267 = scalar_lea.sflag [#allocation3], %s266
        %s268 = sand.u32 %s45, 1
        %s269 = smul.addr %s268, 64
        %s270 = scalar_lea.vmem [#allocation2], %s269
        %p271 = pneg %p58
        %p272 = pneg %p55
        %p273 = pneg %p79
        %p274 = pneg %p76
        %p275 = pneg %p100
        %p276 = pneg %p97
        %p277 = pneg %p121
        %p278 = pneg %p118
        %p279 = pneg %p149
        %p280 = pneg %p146
        %s281 = sand.u32 %s136, 1
        %s282 = scalar_lea.sflag [#allocation4], %s281
        %s283 = sand.u32 %s136, 1
        %s284 = smul.addr %s283, 64
        %s285 = scalar_lea.vmem [#allocation10], %s284
        %s286 = smul.u32 2, %s28
        %s287 = smul.u32 2, %s28
        %v289 = vld [vmem:[%s245] sm:$0xff]
        %v290 = vld [vmem:[%s245 + $0x8] sm:$0xff]
        %v291 = vld [vmem:[%s245 + $0x10] sm:$0xff]
        %v292 = vld [vmem:[%s245 + $0x18] sm:$0xff]
        %v293 = vld [vmem:[%s245 + $0x20] sm:$0xff]
        %v294 = vld [vmem:[%s245 + $0x28] sm:$0xff]
        %v295 = vld [vmem:[%s245 + $0x30] sm:$0xff]
        %v296 = vld [vmem:[%s245 + $0x38] sm:$0xff]
        %v297 = vpack.c.bf16 %v291, %v289
        %v298 = vpack.c.bf16 %v292, %v290
        %v299 = vpack.c.bf16 %v295, %v293
        %v300 = vpack.c.bf16 %v296, %v294
        %v301 = vld [vmem:[#allocation5] sm:$0xf]
        %v302 = vld [vmem:[#allocation5 + $0x4] sm:$0xf]
        %v303 = vld [vmem:[#allocation5 + $0x8] sm:$0xf]
        %v304 = vld [vmem:[#allocation5 + $0xc] sm:$0xf]
        %v309 = vunpack.c.l.b16 %v301
        %v310 = vunpack.c.l.b16 %v302
        %v311 = vunpack.c.l.b16 %v303
        %v312 = vunpack.c.l.b16 %v304
        %v313 = vpack.c.b16 %v310, %v309
        %v314 = vpack.c.b16 %v312, %v311
        %vm315 = vcmask 261120
        %v317 = vsel %vm315, %v313, 0
        %v320 = vsel %vm315, %v314, 0
        %322 = vmatpush.bf16.msra.mxu0 0
        %323 = vmatpush.bf16.msra.mxu0 0
        %324 = vmatpush.bf16.msra.mxu0 0
        %325 = vmatpush.bf16.msra.mxu0 0
        %326 = vmatpush.bf16.msra.mxu0 0
        %327 = vmatpush.bf16.msra.mxu0 0
        %328 = vmatpush.bf16.msra.mxu0 %v299
        %329 = vmatpush.bf16.msra.mxu0 %v297
        %330 = vmatmul.bf16.gmra.mxu0 %v317
        %v331 = vpop.f32.mrf.mxu0
        %v332 = vadd.f32 0.0, %v331
        %v333 = vpop.f32.mrf.mxu0
        %v334 = vadd.f32 0.0, %v333
        %335 = vmatmul.bf16.gmra.mxu0 %v320
        %v336 = vpop.f32.mrf.mxu0
        %v337 = vadd.f32 0.0, %v336
        %v338 = vpop.f32.mrf.mxu0
        %v339 = vadd.f32 0.0, %v338
        %340 = vdwg.mxu0
        %341 = vmatpush.bf16.msra.mxu0 0
        %342 = vmatpush.bf16.msra.mxu0 0
        %343 = vmatpush.bf16.msra.mxu0 0
        %344 = vmatpush.bf16.msra.mxu0 0
        %345 = vmatpush.bf16.msra.mxu0 0
        %346 = vmatpush.bf16.msra.mxu0 0
        %347 = vmatpush.bf16.msra.mxu0 %v300
        %348 = vmatpush.bf16.msra.mxu0 %v298
        %349 = vmatmul.bf16.gmra.mxu0 %v317
        %v350 = vpop.f32.mrf.mxu0
        %v351 = vadd.f32 0.0, %v350
        %v352 = vpop.f32.mrf.mxu0
        %v353 = vadd.f32 0.0, %v352
        %354 = vmatmul.bf16.gmra.mxu0 %v320
        %v355 = vpop.f32.mrf.mxu0
        %v356 = vadd.f32 0.0, %v355
        %v357 = vpop.f32.mrf.mxu0
        %v358 = vadd.f32 0.0, %v357
        %359 = vdwg.mxu0
        %v360 = vmax.f32 %v332, 0.0
        %v361 = vmax.f32 %v351, 0.0
        %v362 = vmax.f32 %v334, 0.0
        %v363 = vmax.f32 %v353, 0.0
        %v364 = vmax.f32 %v337, 0.0
        %v365 = vmax.f32 %v356, 0.0
        %v366 = vmax.f32 %v339, 0.0
        %v367 = vmax.f32 %v358, 0.0
        %v368 = vld [vmem:[#allocation7] sm:$0xf]
        %v369 = vld [vmem:[#allocation7 + $0x4] sm:$0xf]
        %v370 = vld [vmem:[#allocation7 + $0x8] sm:$0xf]
        %v371 = vld [vmem:[#allocation7 + $0xc] sm:$0xf]
        %v372 = vpack.c.bf16 %v362, %v360
        %v373 = vpack.c.bf16 %v363, %v361
        %v374 = vpack.c.bf16 %v366, %v364
        %v375 = vpack.c.bf16 %v367, %v365
        %v380 = vunpack.c.l.b16 %v368
        %v381 = vunpack.c.l.b16 %v369
        %v382 = vunpack.c.l.b16 %v370
        %v383 = vunpack.c.l.b16 %v371
        %v384 = vpack.c.b16 %v381, %v380
        %v385 = vpack.c.b16 %v383, %v382
        %v387 = vsel %vm315, %v384, 0
        %v390 = vsel %vm315, %v385, 0
        %392 = vmatpush.bf16.msra.mxu0 0
        %393 = vmatpush.bf16.msra.mxu0 0
        %394 = vmatpush.bf16.msra.mxu0 0
        %395 = vmatpush.bf16.msra.mxu0 0
        %396 = vmatpush.bf16.msra.mxu0 0
        %397 = vmatpush.bf16.msra.mxu0 0
        %398 = vmatpush.bf16.msra.mxu0 %v374
        %399 = vmatpush.bf16.msra.mxu0 %v372
        %400 = vmatmul.bf16.gmra.mxu0 %v387
        %v401 = vpop.f32.mrf.mxu0
        %v402 = vadd.f32 0.0, %v401
        %v403 = vpop.f32.mrf.mxu0
        %v404 = vadd.f32 0.0, %v403
        %405 = vmatmul.bf16.gmra.mxu0 %v390
        %v406 = vpop.f32.mrf.mxu0
        %v407 = vadd.f32 0.0, %v406
        %v408 = vpop.f32.mrf.mxu0
        %v409 = vadd.f32 0.0, %v408
        %410 = vdwg.mxu0
        %411 = vmatpush.bf16.msra.mxu0 0
        %412 = vmatpush.bf16.msra.mxu0 0
        %413 = vmatpush.bf16.msra.mxu0 0
        %414 = vmatpush.bf16.msra.mxu0 0
        %415 = vmatpush.bf16.msra.mxu0 0
        %416 = vmatpush.bf16.msra.mxu0 0
        %417 = vmatpush.bf16.msra.mxu0 %v375
        %418 = vmatpush.bf16.msra.mxu0 %v373
        %419 = vmatmul.bf16.gmra.mxu0 %v387
        %v420 = vpop.f32.mrf.mxu0
        %v421 = vadd.f32 0.0, %v420
        %v422 = vpop.f32.mrf.mxu0
        %v423 = vadd.f32 0.0, %v422
        %424 = vmatmul.bf16.gmra.mxu0 %v390
        %v425 = vpop.f32.mrf.mxu0
        %v426 = vadd.f32 0.0, %v425
        %v427 = vpop.f32.mrf.mxu0
        %v428 = vadd.f32 0.0, %v427
        %429 = vdwg.mxu0
        %v430 = vmax.f32 %v402, 0.0
        %v431 = vmax.f32 %v421, 0.0
        %v432 = vmax.f32 %v404, 0.0
        %v433 = vmax.f32 %v423, 0.0
        %v434 = vmax.f32 %v407, 0.0
        %v435 = vmax.f32 %v426, 0.0
        %v436 = vmax.f32 %v409, 0.0
        %v437 = vmax.f32 %v428, 0.0
        %v438 = vld [vmem:[#allocation8] sm:$0xf]
        %v439 = vld [vmem:[#allocation8 + $0x4] sm:$0xf]
        %v440 = vld [vmem:[#allocation8 + $0x8] sm:$0xf]
        %v441 = vld [vmem:[#allocation8 + $0xc] sm:$0xf]
        %v442 = vpack.c.bf16 %v432, %v430
        %v443 = vpack.c.bf16 %v433, %v431
        %v444 = vpack.c.bf16 %v436, %v434
        %v445 = vpack.c.bf16 %v437, %v435
        %v450 = vunpack.c.l.b16 %v438
        %v451 = vunpack.c.l.b16 %v439
        %v452 = vunpack.c.l.b16 %v440
        %v453 = vunpack.c.l.b16 %v441
        %v454 = vpack.c.b16 %v451, %v450
        %v455 = vpack.c.b16 %v453, %v452
        %v457 = vsel %vm315, %v454, 0
        %v460 = vsel %vm315, %v455, 0
        %462 = vmatpush.bf16.msra.mxu0 0
        %463 = vmatpush.bf16.msra.mxu0 0
        %464 = vmatpush.bf16.msra.mxu0 0
        %465 = vmatpush.bf16.msra.mxu0 0
        %466 = vmatpush.bf16.msra.mxu0 0
        %467 = vmatpush.bf16.msra.mxu0 0
        %468 = vmatpush.bf16.msra.mxu0 %v444
        %469 = vmatpush.bf16.msra.mxu0 %v442
        %470 = vmatmul.bf16.gmra.mxu0 %v457
        %v471 = vpop.f32.mrf.mxu0
        %v472 = vadd.f32 0.0, %v471
        %v473 = vpop.f32.mrf.mxu0
        %v474 = vadd.f32 0.0, %v473
        %475 = vmatmul.bf16.gmra.mxu0 %v460
        %v476 = vpop.f32.mrf.mxu0
        %v477 = vadd.f32 0.0, %v476
        %v478 = vpop.f32.mrf.mxu0
        %v479 = vadd.f32 0.0, %v478
        %480 = vdwg.mxu0
        %481 = vmatpush.bf16.msra.mxu0 0
        %482 = vmatpush.bf16.msra.mxu0 0
        %483 = vmatpush.bf16.msra.mxu0 0
        %484 = vmatpush.bf16.msra.mxu0 0
        %485 = vmatpush.bf16.msra.mxu0 0
        %486 = vmatpush.bf16.msra.mxu0 0
        %487 = vmatpush.bf16.msra.mxu0 %v445
        %488 = vmatpush.bf16.msra.mxu0 %v443
        %489 = vmatmul.bf16.gmra.mxu0 %v457
        %v490 = vpop.f32.mrf.mxu0
        %v491 = vadd.f32 0.0, %v490
        %v492 = vpop.f32.mrf.mxu0
        %v493 = vadd.f32 0.0, %v492
        %494 = vmatmul.bf16.gmra.mxu0 %v460
        %v495 = vpop.f32.mrf.mxu0
        %v496 = vadd.f32 0.0, %v495
        %v497 = vpop.f32.mrf.mxu0
        %v498 = vadd.f32 0.0, %v497
        %499 = vdwg.mxu0
        %v500 = vmul.f32 %v472, 0.5
        %v501 = vmul.f32 %v491, 0.5
        %v502 = vmul.f32 %v474, 0.5
        %v503 = vmul.f32 %v493, 0.5
        %v504 = vmul.f32 %v477, 0.5
        %v505 = vmul.f32 %v496, 0.5
        %v506 = vmul.f32 %v479, 0.5
        %v507 = vmul.f32 %v498, 0.5
        %v508 = vtanh.pop %v500
        %v509 = vtanh.pop %v501
        %v510 = vtanh.pop %v502
        %v511 = vtanh.pop %v503
        %v512 = vtanh.pop %v504
        %v513 = vtanh.pop %v505
        %v514 = vtanh.pop %v506
        %v515 = vtanh.pop %v507
        %v516 = vmul.f32 %v508, 0.5
        %v517 = vmul.f32 %v509, 0.5
        %v518 = vmul.f32 %v510, 0.5
        %v519 = vmul.f32 %v511, 0.5
        %v520 = vmul.f32 %v512, 0.5
        %v521 = vmul.f32 %v513, 0.5
        %v522 = vmul.f32 %v514, 0.5
        %v523 = vmul.f32 %v515, 0.5
        %v524 = vadd.f32 %v516, 0.5
        %v525 = vadd.f32 %v517, 0.5
        %v526 = vadd.f32 %v518, 0.5
        %v527 = vadd.f32 %v519, 0.5
        %v528 = vadd.f32 %v520, 0.5
        %v529 = vadd.f32 %v521, 0.5
        %v530 = vadd.f32 %v522, 0.5
        %v531 = vadd.f32 %v523, 0.5
        %v532 = vmul.f32 %v524, %v360
        %v533 = vmul.f32 %v525, %v361
        %v534 = vmul.f32 %v526, %v362
        %v535 = vmul.f32 %v527, %v363
        %v536 = vmul.f32 %v528, %v364
        %v537 = vmul.f32 %v529, %v365
        %v538 = vmul.f32 %v530, %v366
        %v539 = vmul.f32 %v531, %v367
        %v540 = vadd.f32 %v532, %v289
        %v541 = vadd.f32 %v533, %v290
        %v542 = vadd.f32 %v534, %v291
        %v543 = vadd.f32 %v535, %v292
        %v544 = vadd.f32 %v536, %v293
        %v545 = vadd.f32 %v537, %v294
        %v546 = vadd.f32 %v538, %v295
        %v547 = vadd.f32 %v539, %v296
        %548 = vst [vmem:[%s285] sm:$0xff] %v540
        %549 = vst [vmem:[%s285 + $0x8] sm:$0xff] %v541
        %550 = vst [vmem:[%s285 + $0x10] sm:$0xff] %v542
        %551 = vst [vmem:[%s285 + $0x18] sm:$0xff] %v543
        %552 = vst [vmem:[%s285 + $0x20] sm:$0xff] %v544
        %553 = vst [vmem:[%s285 + $0x28] sm:$0xff] %v545
        %554 = vst [vmem:[%s285 + $0x30] sm:$0xff] %v546
        %555 = vst [vmem:[%s285 + $0x38] sm:$0xff] %v547
        %s556 = sand.u32 %s136, 1
        %s557 = scalar_lea.sflag [#allocation4], %s556
        %s558 = sand.u32 %s136, 1
        %s559 = smul.addr %s558, 64
        %s560 = scalar_lea.vmem [#allocation10], %s559
        // Predicated region
        $region53: #{tpu_custom_call.1} parent=35 // pred_check
          %p561 = pneg %p146
        $region54: #{tpu_custom_call.1} parent=35 // pred_check_branch
          %563 = sbr.rel (%p561) target = $region56
        $region55: #{tpu_custom_call.1} parent=35 // pred_region
          %s564 = smul.u32 2, %s28
          %566 = vsyncadd %s557, 0
          %s567 = smul.addr %s27, 8
          %s568 = sadd.s32 %s564, %s567
          %s569 = smul.addr %s568, 8
          %s570 = scalar_lea.hbm %s4, %s569
          %s571 = sshll.u32 %s560, 4
          %s572 = int_to_ptr.vmem [resolvable:$true] %s571
          %s573 = sshll.u32 %s570, 4
          %s574 = int_to_ptr.hbm [resolvable:$true] %s573
          %579 = dma.vmem_to_hbm [thread:$0]  %s572, 1024, %s574, %s557, 256, 256, 16
        $region56: #{tpu_custom_call.1} parent=35 // pred_fallthru
          _
      $region36: #{tpu_custom_call.1} parent=5 // pred_fallthru
        _
      %p580 = scmp.le.s32.totalorder 2, %s18
      // Predicated region
      $region57: #{tpu_custom_call.1} parent=5 // pred_check
        %p581 = pneg %p580
      $region58: #{tpu_custom_call.1} parent=5 // pred_check_branch
        %583 = sbr.rel (%p581) target = $region60
      $region59: #{tpu_custom_call.1} parent=5 // pred_region
        %s584 = ssub.s32 %s18, 2
        // Predicated region
        $region61: #{tpu_custom_call.1} parent=59 // pred_check
          %p585 = pneg %p152
        $region62: #{tpu_custom_call.1} parent=59 // pred_check_branch
          %587 = sbr.rel (%p585) target = $region64
        $region63: #{tpu_custom_call.1} parent=59 // pred_region
          %s588 = sand.u32 %s137, 1
          %s589 = scalar_lea.sflag [#allocation4], %s588
          %s590 = sand.u32 %s137, 1
          %s591 = smul.addr %s590, 64
          %s592 = scalar_lea.vmem [#allocation10], %s591
          %594 = dma.done %s589, 1024
        $region64: #{tpu_custom_call.1} parent=59 // pred_fallthru
          _
      $region60: #{tpu_custom_call.1} parent=5 // pred_fallthru
        _
    $region6: #{tpu_custom_call.1} parent=1 // loop_footer
      %s22 = sadd.s32 1, %s18
    $region7: #{tpu_custom_call.1} parent=1 // loop_footer_branch
      %17 = sbr.rel target = $region3
    $region8: #{tpu_custom_call.1} parent=1 // loop_exit
      _
    %595 = vsyncpa [#allocation3], 1
    %s596 = scalar_lea.sflag [#allocation3], 1
    %597 = vsyncpa %s596, 1
    %598 = vsyncpa [#allocation6], 1
    %599 = vsyncpa [#allocation9], 1
    %600 = vsyncpa [#allocation4], 1
    %s601 = scalar_lea.sflag [#allocation4], 1
    %602 = vsyncpa %s601, 1

</llo_original>
